<compile_context>
chip_gen: v6e
topology: v6e:2x2x1
jax: 0.10.0
libtpu: 0.0.40
codegen_flags: <defaults>
</compile_context>

<pallas_src>
import jax
import jax.numpy as jnp
from jax.experimental import pallas as pl
from jax.experimental.pallas import tpu as pltpu


_MAX_TILE_HW = 8192        # lanes per spatial tile (multiple of 128)
_MAX_BATCH_MERGE = 16      # cap on the statically-unrolled in-kernel batch loop


def make_fcomb_kernel(n_hidden, batch_block, emit_latent):
    """Kernel for `n_hidden` (conv1x1 + ReLU) layers + final conv1x1.

    Ref order:
      fm (bb, F, tile_hw), zproj (bb, Fh, 1), w0f (Fh, F),
      [w_i (Fh, Fh), b_i (Fh, 1)] for hidden layers 1..n_hidden-1,
      w_last (num_classes, Fh), b_last (num_classes, 1),
      out (bb, num_classes, tile_hw) [, latent (bb, Fh, tile_hw)]
    """
    n_rest = n_hidden - 1

    def kernel(fm_ref, zproj_ref, w0_ref, *refs):
        # Weight blocks are resident (constant index_map); load once per step.
        w0 = w0_ref[...]
        hidden = [(refs[2 * i][...], refs[2 * i + 1][...]) for i in range(n_rest)]
        wl = refs[2 * n_rest][...]
        bl = refs[2 * n_rest + 1][...]
        out_ref = refs[2 * n_rest + 2]
        latent_ref = refs[2 * n_rest + 3] if emit_latent else None

        # Statically-unrolled loop over the batch slab of this block
        # (batch_block == 1 for the tiled large-spatial path).
        for b in range(batch_block):
            # First 1x1 conv: only the feature-map part of the matmul runs
            # here; the z part (z @ W0_z^T + b0) is folded into zproj.
            h = jnp.dot(w0, fm_ref[b], preferred_element_type=jnp.float32)
            h = jnp.maximum(h + zproj_ref[b], 0.0)

            # Remaining hidden 1x1 convs (matmul + bias) with ReLU.
            for (w, bias) in hidden:
                h = jnp.maximum(
                    jnp.dot(w, h, preferred_element_type=jnp.float32) + bias, 0.0)

            # `latent` returned by forward() (latent_type='fcomb').
            if emit_latent:
                latent_ref[b] = h.astype(latent_ref.dtype)

            # Final 1x1 conv to num_classes (no activation).
            out_ref[b] = (jnp.dot(wl, h, preferred_element_type=jnp.float32)
                          + bl).astype(out_ref.dtype)

    return kernel


def _pick_tiling(B, HW, tile_hw, max_tile):
    """Choose (batch_block, tile_hw, hw_pad). Avoids padding whenever possible."""
    max_tile = max(128, (max_tile // 128) * 128)
    if tile_hw is not None:
        if not (tile_hw == HW or tile_hw % 128 == 0):
            raise ValueError(
                f"tile_hw={tile_hw} must be a multiple of 128 or equal HW={HW}")
        hw_pad = pl.cdiv(HW, tile_hw) * tile_hw
        return 1, tile_hw, hw_pad
    # Small total spatial work: merge all batches into one grid step.
    if B * HW <= max_tile and B <= _MAX_BATCH_MERGE:
        return B, HW, HW
    # One batch per step, full spatial extent as a single (legal) block.
    if HW <= max_tile:
        return 1, HW, HW
    # Largest 128-multiple divisor of HW that fits the tile cap -> no padding.
    t = max_tile
    while t >= 128:
        if HW % t == 0:
            return 1, t, HW
        t -= 128
    # Rare fallback: pad to a multiple of the tile cap.
    return 1, max_tile, pl.cdiv(HW, max_tile) * max_tile


def fcomb_forward(feature_map, z, weights, biases, *, tile_hw=None,
                  return_latent=True, max_tile=_MAX_TILE_HW):
    """Pallas implementation of Fcomb.forward(feature_map, z, 'fcomb').

    feature_map: (B, F, H, W) float32  (NCHW, like PyTorch)
    z:           (B, L)       float32
    weights:     list of (out_ch, in_ch) 1x1-conv weights (PyTorch w[:, :, 0, 0])
    biases:      list of (out_ch,) biases
    Returns (output, latent) if return_latent else output, all NCHW.
    """
    B, F, H, W = feature_map.shape
    HW = H * W
    n_hidden = len(weights) - 1
    n_rest = n_hidden - 1
    Fh = weights[0].shape[0]           # num_filters[0]
    num_classes = weights[-1].shape[0]

    # --- fold z into the first conv: no HBM concat / broadcast of z ---------
    w0f = weights[0][:, :F]                                  # (Fh, F)
    w0z = weights[0][:, F:]                                  # (Fh, L)
    zproj = (z @ w0z.T + biases[0][None, :]).reshape(B, Fh, 1)

    # --- NCHW-native view: spatial axis on the lanes (free reshape) ---------
    fm = feature_map.reshape(B, F, HW)

    bb, tile_hw, hw_pad = _pick_tiling(B, HW, tile_hw, max_tile)
    if hw_pad != HW:   # rare fallback only (no 128-multiple divisor of HW)
        fm = jnp.pad(fm, ((0, 0), (0, 0), (0, hw_pad - HW)))

    grid = (B // bb, hw_pad // tile_hw)

    in_specs = [
        pl.BlockSpec((bb, F, tile_hw), lambda gb, t: (gb, 0, t)),   # fm
        pl.BlockSpec((bb, Fh, 1), lambda gb, t: (gb, 0, 0)),        # zproj
        pl.BlockSpec((Fh, F), lambda gb, t: (0, 0)),                # w0f
    ]
    args = [fm, zproj, w0f]
    for w, b in zip(weights[1:], biases[1:]):
        in_specs.append(pl.BlockSpec(w.shape, lambda gb, t: (0, 0)))
        in_specs.append(pl.BlockSpec((w.shape[0], 1), lambda gb, t: (0, 0)))
        args.append(w)
        args.append(b.reshape(-1, 1))

    out_specs = [
        pl.BlockSpec((bb, num_classes, tile_hw), lambda gb, t: (gb, 0, t)),
    ]
    out_shape = [
        jax.ShapeDtypeStruct((B, num_classes, hw_pad), jnp.float32),
    ]
    if return_latent:
        out_specs.append(pl.BlockSpec((bb, Fh, tile_hw), lambda gb, t: (gb, 0, t)))
        out_shape.append(jax.ShapeDtypeStruct((B, Fh, hw_pad), jnp.float32))

    # Advisory cost estimate (kernel is memory/overhead bound, not MXU bound).
    flops = 2 * B * hw_pad * (Fh * F + n_rest * Fh * Fh + num_classes * Fh)
    param_elems = (w0f.size + sum(w.size for w in weights[1:])
                   + sum(b.size for b in biases[1:]))
    out_elems = B * hw_pad * (num_classes + (Fh if return_latent else 0))
    bytes_accessed = 4 * (B * F * hw_pad + zproj.size + param_elems + out_elems)
    cost = pl.CostEstimate(flops=flops, transcendentals=0,
                           bytes_accessed=bytes_accessed)

    results = pl.pallas_call(
        make_fcomb_kernel(n_hidden, bb, return_latent),
        grid=grid,
        in_specs=in_specs,
        out_specs=out_specs,
        out_shape=out_shape,
        compiler_params=pltpu.CompilerParams(
            dimension_semantics=("parallel", "parallel")),
        cost_estimate=cost,
    )(*args)

    out_flat = results[0]
    if hw_pad != HW:
        out_flat = out_flat[:, :, :HW]
    output = out_flat.reshape(B, num_classes, H, W)
    if not return_latent:
        return output
    latent_flat = results[1]
    if hw_pad != HW:
        latent_flat = latent_flat[:, :, :HW]
    latent = latent_flat.reshape(B, Fh, H, W)
    return output, latent


def fcomb_reference(feature_map, z, weights, biases):
    """Pure-JAX reference mirroring the PyTorch forward (latent_type='fcomb')."""
    B, F, H, W = feature_map.shape
    L = z.shape[1]
    z_t = jnp.broadcast_to(z[:, :, None, None], (B, L, H, W))
    h = jnp.concatenate([feature_map, z_t], axis=1)            # (B, F+L, H, W)
    for w, b in zip(weights[:-1], biases[:-1]):
        h = jnp.maximum(
            jnp.einsum("oc,bchw->bohw", w, h) + b[None, :, None, None], 0.0)
    latent = h
    out = (jnp.einsum("oc,bchw->bohw", weights[-1], h)
           + biases[-1][None, :, None, None])
    return out, latent


if __name__ == "__main__":
    # Module hyperparameters (num_convs_fcomb = 4 -> 3 convs in self.layers + last_layer)
    num_filters = [32, 64, 128, 192]
    latent_dim = 6
    num_classes = 2
    num_convs_fcomb = 4

    B, H, W = 2, 16, 16
    F0 = num_filters[0]
    Cin = F0 + latent_dim

    key = jax.random.PRNGKey(0)
    keys = jax.random.split(key, 20)

    # Deterministic parameter init (stand-in for orthogonal/normal init).
    # Conv2d 1x1 weights (out, in, 1, 1) are stored here as (out, in) matrices.
    # TODO(synk): PyTorch orthogonal/normal weight init is host-side and not
    # reproduced bit-exactly; random stand-ins keep the math identical.
    weights, biases = [], []
    in_ch = Cin
    k_idx = 0
    for _ in range(num_convs_fcomb - 1):          # self.layers convs
        weights.append(jax.random.normal(keys[k_idx], (F0, in_ch), jnp.float32) * 0.1)
        biases.append(jax.random.normal(keys[k_idx + 1], (F0,), jnp.float32) * 0.01)
        in_ch = F0
        k_idx += 2
    # last_layer
    weights.append(jax.random.normal(keys[k_idx], (num_classes, F0), jnp.float32) * 0.1)
    biases.append(jax.random.normal(keys[k_idx + 1], (num_classes,), jnp.float32) * 0.01)
    k_idx += 2

    # --- Test 1: toy shape (merged-batch single-step path) ------------------
    feature_map = jax.random.normal(keys[k_idx], (B, F0, H, W), jnp.float32)
    z = jax.random.normal(keys[k_idx + 1], (B, latent_dim), jnp.float32)
    k_idx += 2

    out, latent = fcomb_forward(feature_map, z, weights, biases)
    out = jax.block_until_ready(out)
    latent = jax.block_until_ready(latent)

    out_ref, latent_ref = fcomb_reference(feature_map, z, weights, biases)
    assert out.shape == (B, num_classes, H, W)
    assert latent.shape == (B, F0, H, W)
    assert jnp.allclose(out, out_ref, atol=1e-4, rtol=1e-4)
    assert jnp.allclose(latent, latent_ref, atol=1e-4, rtol=1e-4)

    # --- Test 2: larger spatial (per-batch tiled grid + latent-skip path) ---
    H2, W2 = 128, 128
    feature_map2 = jax.random.normal(keys[k_idx], (B, F0, H2, W2), jnp.float32)
    z2 = jax.random.normal(keys[k_idx + 1], (B, latent_dim), jnp.float32)

    out2, latent2 = fcomb_forward(feature_map2, z2, weights, biases)
    out2 = jax.block_until_ready(out2)
    latent2 = jax.block_until_ready(latent2)
    out2_ref, latent2_ref = fcomb_reference(feature_map2, z2, weights, biases)
    assert jnp.allclose(out2, out2_ref, atol=1e-4, rtol=1e-4)
    assert jnp.allclose(latent2, latent2_ref, atol=1e-4, rtol=1e-4)

    out2_only = fcomb_forward(feature_map2, z2, weights, biases,
                              return_latent=False)
    out2_only = jax.block_until_ready(out2_only)
    assert jnp.allclose(out2_only, out2_ref, atol=1e-4, rtol=1e-4)

    print("KERNEL_OK")
</pallas_src>

<mosaic_0001>
module attributes {stable_mosaic.version = 11 : i64} {
  func.func @kernel(%arg0: i32, %arg1: i32, %arg2: memref<2x32x256xf32, #tpu.memory_space<vmem>>, %arg3: memref<2x32x1xf32, #tpu.memory_space<vmem>>, %arg4: memref<32x32xf32, #tpu.memory_space<vmem>>, %arg5: memref<32x32xf32, #tpu.memory_space<vmem>>, %arg6: memref<32x1xf32, #tpu.memory_space<vmem>>, %arg7: memref<32x32xf32, #tpu.memory_space<vmem>>, %arg8: memref<32x1xf32, #tpu.memory_space<vmem>>, %arg9: memref<2x32xf32, #tpu.memory_space<vmem>>, %arg10: memref<2x1xf32, #tpu.memory_space<vmem>>, %arg11: memref<2x2x256xf32, #tpu.memory_space<vmem>>, %arg12: memref<2x32x256xf32, #tpu.memory_space<vmem>>) attributes {dimension_semantics = [#tpu.dimension_semantics<parallel>, #tpu.dimension_semantics<parallel>], iteration_bounds = array<i64: 1, 1>, scalar_prefetch = 0 : i64, scratch_operands = 0 : i64, tpu.core_type = #tpu.core_type<tc>, window_params = [{transform_indices = @transform_0, window_bounds = array<i64: 2, 32, 256>}, {transform_indices = @transform_1, window_bounds = array<i64: 2, 32, 1>}, {pipeline_mode = #tpu.pipeline_mode<synchronous>, transform_indices = @transform_2, window_bounds = array<i64: 32, 32>}, {pipeline_mode = #tpu.pipeline_mode<synchronous>, transform_indices = @transform_3, window_bounds = array<i64: 32, 32>}, {pipeline_mode = #tpu.pipeline_mode<synchronous>, transform_indices = @transform_4, window_bounds = array<i64: 32, 1>}, {pipeline_mode = #tpu.pipeline_mode<synchronous>, transform_indices = @transform_5, window_bounds = array<i64: 32, 32>}, {pipeline_mode = #tpu.pipeline_mode<synchronous>, transform_indices = @transform_6, window_bounds = array<i64: 32, 1>}, {pipeline_mode = #tpu.pipeline_mode<synchronous>, transform_indices = @transform_7, window_bounds = array<i64: 2, 32>}, {pipeline_mode = #tpu.pipeline_mode<synchronous>, transform_indices = @transform_8, window_bounds = array<i64: 2, 1>}, {transform_indices = @transform_9, window_bounds = array<i64: 2, 2, 256>}, {transform_indices = @transform_10, window_bounds = array<i64: 2, 32, 256>}]} {
    %c0 = arith.constant 0 : index
    %c0_0 = arith.constant 0 : index
    %0 = vector.load %arg4[%c0, %c0_0] : memref<32x32xf32, #tpu.memory_space<vmem>>, vector<32x32xf32>
    %c0_1 = arith.constant 0 : index
    %c0_2 = arith.constant 0 : index
    %1 = vector.load %arg5[%c0_1, %c0_2] : memref<32x32xf32, #tpu.memory_space<vmem>>, vector<32x32xf32>
    %c0_3 = arith.constant 0 : index
    %c0_4 = arith.constant 0 : index
    %2 = vector.load %arg6[%c0_3, %c0_4] : memref<32x1xf32, #tpu.memory_space<vmem>>, vector<32x1xf32>
    %c0_5 = arith.constant 0 : index
    %c0_6 = arith.constant 0 : index
    %3 = vector.load %arg7[%c0_5, %c0_6] : memref<32x32xf32, #tpu.memory_space<vmem>>, vector<32x32xf32>
    %c0_7 = arith.constant 0 : index
    %c0_8 = arith.constant 0 : index
    %4 = vector.load %arg8[%c0_7, %c0_8] : memref<32x1xf32, #tpu.memory_space<vmem>>, vector<32x1xf32>
    %c0_9 = arith.constant 0 : index
    %c0_10 = arith.constant 0 : index
    %5 = vector.load %arg9[%c0_9, %c0_10] : memref<2x32xf32, #tpu.memory_space<vmem>>, vector<2x32xf32>
    %c0_11 = arith.constant 0 : index
    %c0_12 = arith.constant 0 : index
    %6 = vector.load %arg10[%c0_11, %c0_12] : memref<2x1xf32, #tpu.memory_space<vmem>>, vector<2x1xf32>
    %c0_13 = arith.constant 0 : index
    %c0_14 = arith.constant 0 : index
    %c0_15 = arith.constant 0 : index
    %7 = vector.load %arg2[%c0_13, %c0_14, %c0_15] : memref<2x32x256xf32, #tpu.memory_space<vmem>>, vector<1x32x256xf32>
    %8 = vector.shape_cast %7 : vector<1x32x256xf32> to vector<32x256xf32>
    %cst = arith.constant dense<0.000000e+00> : vector<32x256xf32>
    %9 = tpu.matmul %0, %8, %cst {dimension_numbers = #tpu.dot_dimension_numbers<[1], [0], [0], [1], [0, 0, 1, 1], [], []>} : vector<32x32xf32>, vector<32x256xf32>, vector<32x256xf32> -> vector<32x256xf32>
    %c0_16 = arith.constant 0 : index
    %c0_17 = arith.constant 0 : index
    %c0_18 = arith.constant 0 : index
    %10 = vector.load %arg3[%c0_16, %c0_17, %c0_18] : memref<2x32x1xf32, #tpu.memory_space<vmem>>, vector<1x32x1xf32>
    %11 = vector.shape_cast %10 : vector<1x32x1xf32> to vector<32x1xf32>
    %12 = vector.broadcast %11 : vector<32x1xf32> to vector<32x256xf32>
    %13 = arith.addf %9, %12 : vector<32x256xf32>
    %cst_19 = arith.constant 0.000000e+00 : f32
    %14 = vector.broadcast %cst_19 : f32 to vector<32x256xf32>
    %15 = arith.maximumf %13, %14 : vector<32x256xf32>
    %cst_20 = arith.constant dense<0.000000e+00> : vector<32x256xf32>
    %16 = tpu.matmul %1, %15, %cst_20 {dimension_numbers = #tpu.dot_dimension_numbers<[1], [0], [0], [1], [0, 0, 1, 1], [], []>} : vector<32x32xf32>, vector<32x256xf32>, vector<32x256xf32> -> vector<32x256xf32>
    %17 = vector.broadcast %2 : vector<32x1xf32> to vector<32x256xf32>
    %18 = arith.addf %16, %17 : vector<32x256xf32>
    %cst_21 = arith.constant 0.000000e+00 : f32
    %19 = vector.broadcast %cst_21 : f32 to vector<32x256xf32>
    %20 = arith.maximumf %18, %19 : vector<32x256xf32>
    %cst_22 = arith.constant dense<0.000000e+00> : vector<32x256xf32>
    %21 = tpu.matmul %3, %20, %cst_22 {dimension_numbers = #tpu.dot_dimension_numbers<[1], [0], [0], [1], [0, 0, 1, 1], [], []>} : vector<32x32xf32>, vector<32x256xf32>, vector<32x256xf32> -> vector<32x256xf32>
    %22 = vector.broadcast %4 : vector<32x1xf32> to vector<32x256xf32>
    %23 = arith.addf %21, %22 : vector<32x256xf32>
    %cst_23 = arith.constant 0.000000e+00 : f32
    %24 = vector.broadcast %cst_23 : f32 to vector<32x256xf32>
    %25 = arith.maximumf %23, %24 : vector<32x256xf32>
    %c0_24 = arith.constant 0 : index
    %c0_25 = arith.constant 0 : index
    %c0_26 = arith.constant 0 : index
    %26 = vector.load %arg12[%c0_24, %c0_25, %c0_26] : memref<2x32x256xf32, #tpu.memory_space<vmem>>, vector<1x32x256xf32>
    %27 = vector.shape_cast %26 : vector<1x32x256xf32> to vector<32x256xf32>
    %28 = vector.shape_cast %25 : vector<32x256xf32> to vector<1x32x256xf32>
    tpu.vector_store %arg12[%c0_24, %c0_25, %c0_26], %28 {strides = array<i32>} : memref<2x32x256xf32, #tpu.memory_space<vmem>>, vector<1x32x256xf32>,
    %cst_27 = arith.constant dense<0.000000e+00> : vector<2x256xf32>
    %29 = tpu.matmul %5, %25, %cst_27 {dimension_numbers = #tpu.dot_dimension_numbers<[1], [0], [0], [1], [0, 0, 1, 1], [], []>} : vector<2x32xf32>, vector<32x256xf32>, vector<2x256xf32> -> vector<2x256xf32>
    %30 = vector.broadcast %6 : vector<2x1xf32> to vector<2x256xf32>
    %31 = arith.addf %29, %30 : vector<2x256xf32>
    %c0_28 = arith.constant 0 : index
    %c0_29 = arith.constant 0 : index
    %c0_30 = arith.constant 0 : index
    %32 = vector.load %arg11[%c0_28, %c0_29, %c0_30] : memref<2x2x256xf32, #tpu.memory_space<vmem>>, vector<1x2x256xf32>
    %33 = vector.shape_cast %32 : vector<1x2x256xf32> to vector<2x256xf32>
    %34 = vector.shape_cast %31 : vector<2x256xf32> to vector<1x2x256xf32>
    tpu.vector_store %arg11[%c0_28, %c0_29, %c0_30], %34 {strides = array<i32>} : memref<2x2x256xf32, #tpu.memory_space<vmem>>, vector<1x2x256xf32>,
    %c1 = arith.constant 1 : index
    %c0_31 = arith.constant 0 : index
    %c0_32 = arith.constant 0 : index
    %35 = vector.load %arg2[%c1, %c0_31, %c0_32] : memref<2x32x256xf32, #tpu.memory_space<vmem>>, vector<1x32x256xf32>
    %36 = vector.shape_cast %35 : vector<1x32x256xf32> to vector<32x256xf32>
    %cst_33 = arith.constant dense<0.000000e+00> : vector<32x256xf32>
    %37 = tpu.matmul %0, %36, %cst_33 {dimension_numbers = #tpu.dot_dimension_numbers<[1], [0], [0], [1], [0, 0, 1, 1], [], []>} : vector<32x32xf32>, vector<32x256xf32>, vector<32x256xf32> -> vector<32x256xf32>
    %c1_34 = arith.constant 1 : index
    %c0_35 = arith.constant 0 : index
    %c0_36 = arith.constant 0 : index
    %38 = vector.load %arg3[%c1_34, %c0_35, %c0_36] : memref<2x32x1xf32, #tpu.memory_space<vmem>>, vector<1x32x1xf32>
    %39 = vector.shape_cast %38 : vector<1x32x1xf32> to vector<32x1xf32>
    %40 = vector.broadcast %39 : vector<32x1xf32> to vector<32x256xf32>
    %41 = arith.addf %37, %40 : vector<32x256xf32>
    %cst_37 = arith.constant 0.000000e+00 : f32
    %42 = vector.broadcast %cst_37 : f32 to vector<32x256xf32>
    %43 = arith.maximumf %41, %42 : vector<32x256xf32>
    %cst_38 = arith.constant dense<0.000000e+00> : vector<32x256xf32>
    %44 = tpu.matmul %1, %43, %cst_38 {dimension_numbers = #tpu.dot_dimension_numbers<[1], [0], [0], [1], [0, 0, 1, 1], [], []>} : vector<32x32xf32>, vector<32x256xf32>, vector<32x256xf32> -> vector<32x256xf32>
    %45 = vector.broadcast %2 : vector<32x1xf32> to vector<32x256xf32>
    %46 = arith.addf %44, %45 : vector<32x256xf32>
    %cst_39 = arith.constant 0.000000e+00 : f32
    %47 = vector.broadcast %cst_39 : f32 to vector<32x256xf32>
    %48 = arith.maximumf %46, %47 : vector<32x256xf32>
    %cst_40 = arith.constant dense<0.000000e+00> : vector<32x256xf32>
    %49 = tpu.matmul %3, %48, %cst_40 {dimension_numbers = #tpu.dot_dimension_numbers<[1], [0], [0], [1], [0, 0, 1, 1], [], []>} : vector<32x32xf32>, vector<32x256xf32>, vector<32x256xf32> -> vector<32x256xf32>
    %50 = vector.broadcast %4 : vector<32x1xf32> to vector<32x256xf32>
    %51 = arith.addf %49, %50 : vector<32x256xf32>
    %cst_41 = arith.constant 0.000000e+00 : f32
    %52 = vector.broadcast %cst_41 : f32 to vector<32x256xf32>
    %53 = arith.maximumf %51, %52 : vector<32x256xf32>
    %c1_42 = arith.constant 1 : index
    %c0_43 = arith.constant 0 : index
    %c0_44 = arith.constant 0 : index
    %54 = vector.load %arg12[%c1_42, %c0_43, %c0_44] : memref<2x32x256xf32, #tpu.memory_space<vmem>>, vector<1x32x256xf32>
    %55 = vector.shape_cast %54 : vector<1x32x256xf32> to vector<32x256xf32>
    %56 = vector.shape_cast %53 : vector<32x256xf32> to vector<1x32x256xf32>
    tpu.vector_store %arg12[%c1_42, %c0_43, %c0_44], %56 {strides = array<i32>} : memref<2x32x256xf32, #tpu.memory_space<vmem>>, vector<1x32x256xf32>,
    %cst_45 = arith.constant dense<0.000000e+00> : vector<2x256xf32>
    %57 = tpu.matmul %5, %53, %cst_45 {dimension_numbers = #tpu.dot_dimension_numbers<[1], [0], [0], [1], [0, 0, 1, 1], [], []>} : vector<2x32xf32>, vector<32x256xf32>, vector<2x256xf32> -> vector<2x256xf32>
    %58 = vector.broadcast %6 : vector<2x1xf32> to vector<2x256xf32>
    %59 = arith.addf %57, %58 : vector<2x256xf32>
    %c1_46 = arith.constant 1 : index
    %c0_47 = arith.constant 0 : index
    %c0_48 = arith.constant 0 : index
    %60 = vector.load %arg11[%c1_46, %c0_47, %c0_48] : memref<2x2x256xf32, #tpu.memory_space<vmem>>, vector<1x2x256xf32>
    %61 = vector.shape_cast %60 : vector<1x2x256xf32> to vector<2x256xf32>
    %62 = vector.shape_cast %59 : vector<2x256xf32> to vector<1x2x256xf32>
    tpu.vector_store %arg11[%c1_46, %c0_47, %c0_48], %62 {strides = array<i32>} : memref<2x2x256xf32, #tpu.memory_space<vmem>>, vector<1x2x256xf32>,
    return
  }
  func.func @transform_0(%arg0: i32, %arg1: i32) -> (i32, i32, i32) {
    %c0_i32 = arith.constant 0 : i32
    %c0_i32_0 = arith.constant 0 : i32
    return %arg0, %c0_i32, %arg1 : i32, i32, i32
  }
  func.func @transform_1(%arg0: i32, %arg1: i32) -> (i32, i32, i32) {
    %c0_i32 = arith.constant 0 : i32
    %c0_i32_0 = arith.constant 0 : i32
    %c0_i32_1 = arith.constant 0 : i32
    return %arg0, %c0_i32, %c0_i32_0 : i32, i32, i32
  }
  func.func @transform_2(%arg0: i32, %arg1: i32) -> (i32, i32) {
    %c0_i32 = arith.constant 0 : i32
    %c0_i32_0 = arith.constant 0 : i32
    %c0_i32_1 = arith.constant 0 : i32
    return %c0_i32, %c0_i32_0 : i32, i32
  }
  func.func @transform_3(%arg0: i32, %arg1: i32) -> (i32, i32) {
    %c0_i32 = arith.constant 0 : i32
    %c0_i32_0 = arith.constant 0 : i32
    %c0_i32_1 = arith.constant 0 : i32
    return %c0_i32, %c0_i32_0 : i32, i32
  }
  func.func @transform_4(%arg0: i32, %arg1: i32) -> (i32, i32) {
    %c0_i32 = arith.constant 0 : i32
    %c0_i32_0 = arith.constant 0 : i32
    %c0_i32_1 = arith.constant 0 : i32
    return %c0_i32, %c0_i32_0 : i32, i32
  }
  func.func @transform_5(%arg0: i32, %arg1: i32) -> (i32, i32) {
    %c0_i32 = arith.constant 0 : i32
    %c0_i32_0 = arith.constant 0 : i32
    %c0_i32_1 = arith.constant 0 : i32
    return %c0_i32, %c0_i32_0 : i32, i32
  }
  func.func @transform_6(%arg0: i32, %arg1: i32) -> (i32, i32) {
    %c0_i32 = arith.constant 0 : i32
    %c0_i32_0 = arith.constant 0 : i32
    %c0_i32_1 = arith.constant 0 : i32
    return %c0_i32, %c0_i32_0 : i32, i32
  }
  func.func @transform_7(%arg0: i32, %arg1: i32) -> (i32, i32) {
    %c0_i32 = arith.constant 0 : i32
    %c0_i32_0 = arith.constant 0 : i32
    %c0_i32_1 = arith.constant 0 : i32
    return %c0_i32, %c0_i32_0 : i32, i32
  }
  func.func @transform_8(%arg0: i32, %arg1: i32) -> (i32, i32) {
    %c0_i32 = arith.constant 0 : i32
    %c0_i32_0 = arith.constant 0 : i32
    %c0_i32_1 = arith.constant 0 : i32
    return %c0_i32, %c0_i32_0 : i32, i32
  }
  func.func @transform_9(%arg0: i32, %arg1: i32) -> (i32, i32, i32) {
    %c0_i32 = arith.constant 0 : i32
    %c0_i32_0 = arith.constant 0 : i32
    return %arg0, %c0_i32, %arg1 : i32, i32, i32
  }
  func.func @transform_10(%arg0: i32, %arg1: i32) -> (i32, i32, i32) {
    %c0_i32 = arith.constant 0 : i32
    %c0_i32_0 = arith.constant 0 : i32
    return %arg0, %c0_i32, %arg1 : i32, i32, i32
  }
}

</mosaic_0001>

<llo_original>
// kernel: tpu_custom_call.1
$region0: #{tpu_custom_call.1}
  #allocation0 [shape = 'u32[]', space=smem, size = 0x4, offset = 0x4, fixed_abs, tag = 'smem constant byte address 0x4 - core index']
  #allocation1 [shape = 'u32[144,128]{1,0:T(1,128)}', space=vmem, size = 0x12000, scoped, tag = 'internal scratch']
  %s0 = inlined_call_operand.vmem [shape: f32[2,32,256], index: 0, kind: input, shape index: {}]
  %s1 = inlined_call_operand.vmem [shape: f32[2,32,1], index: 1, kind: input, shape index: {}]
  %s2 = inlined_call_operand.hbm [shape: f32[32,32], index: 2, kind: input, shape index: {}]
  %s3 = inlined_call_operand.hbm [shape: f32[32,32], index: 3, kind: input, shape index: {}]
  %s4 = inlined_call_operand.vmem [shape: f32[32,1], index: 4, kind: input, shape index: {}]
  %s5 = inlined_call_operand.hbm [shape: f32[32,32], index: 5, kind: input, shape index: {}]
  %s6 = inlined_call_operand.vmem [shape: f32[32,1], index: 6, kind: input, shape index: {}]
  %s7 = inlined_call_operand.vmem [shape: f32[2,32], index: 7, kind: input, shape index: {}]
  %s8 = inlined_call_operand.vmem [shape: f32[2,1], index: 8, kind: input, shape index: {}]
  %s9 = inlined_call_operand.hbm [shape: f32[2,2,256], index: 9, kind: output, shape index: {0}]
  %s10 = inlined_call_operand.hbm [shape: f32[2,32,256], index: 10, kind: output, shape index: {1}]
  %11 = xla_tuple %s9, %s10
  %s12 = sld [smem:[#allocation0]]
  $region66: #{tpu_custom_call.1} parent=0
    _
  %s14 = ssub.s32 1, %s12
  %s15 = scalar_select 0, %s14, %s12
  $region1: #{tpu_custom_call.1} parent=0
    #allocation2 [shape = 'u8[16384]{0}', space=vmem, size = 0x4000, scoped, tag = 'input window, operand 2, single buffered']
    #allocation3 [shape = 's32[1]{0}', space=sflag, size = 0x4, scoped, tag = 'scoped memory for tpu_custom_call.1']
    #allocation4 [shape = 's32[1]{0}', space=sflag, size = 0x4, scoped, tag = 'scoped memory for tpu_custom_call.1']
    #allocation5 [shape = 'u8[16384]{0}', space=vmem, size = 0x4000, scoped, tag = 'input window, operand 3, single buffered']
    #allocation6 [shape = 's32[1]{0}', space=sflag, size = 0x4, scoped, tag = 'scoped memory for tpu_custom_call.1']
    #allocation7 [shape = 'u8[16384]{0}', space=vmem, size = 0x4000, scoped, tag = 'input window, operand 5, single buffered']
    #allocation8 [shape = 'u8[4096]{0}', space=vmem, size = 0x1000, scoped, tag = 'output window, operand 0, single buffered']
    #allocation9 [shape = 'u8[65536]{0}', space=vmem, size = 0x10000, scoped, tag = 'output window, operand 1, single buffered']
    #allocation10 [shape = 's32[1]{0}', space=sflag, size = 0x4, scoped, tag = 'scoped memory for tpu_custom_call.1']
    %16 = vsyncpa [#allocation3], 0
    %17 = vsyncpa [#allocation6], 0
    %18 = vsyncpa [#allocation4], 0
    %19 = vsyncpa [#allocation10], 0
    // Predicated region
    $region2: #{tpu_custom_call.1} parent=1 // pred_check
      _
    $region3: #{tpu_custom_call.1} parent=1 // pred_check_branch
      %21 = sbr.rel (0) target = $region5
    $region4: #{tpu_custom_call.1} parent=1 // pred_region
      _
    $region5: #{tpu_custom_call.1} parent=1 // pred_fallthru
      _
    // Predicated region
    $region6: #{tpu_custom_call.1} parent=1 // pred_check
      _
    $region7: #{tpu_custom_call.1} parent=1 // pred_check_branch
      %23 = sbr.rel (0) target = $region9
    $region8: #{tpu_custom_call.1} parent=1 // pred_region
      _
    $region9: #{tpu_custom_call.1} parent=1 // pred_fallthru
      _
    // Predicated region
    $region10: #{tpu_custom_call.1} parent=1 // pred_check
      _
    $region11: #{tpu_custom_call.1} parent=1 // pred_check_branch
      %25 = sbr.rel (0) target = $region13
    $region12: #{tpu_custom_call.1} parent=1 // pred_region
      %s27 = ssub.s32 512, 512
      %28 = vsyncadd [#allocation3], %s27
      %s29 = sshll.u32 [#allocation2], 4
      %s30 = int_to_ptr.vmem [resolvable:$true] %s29
      %35 = dma.hbm_to_vmem [thread:$0]  %s2, 512, %s30, [#allocation3], 128, 128, 8
    $region13: #{tpu_custom_call.1} parent=1 // pred_fallthru
      _
    // Predicated region
    $region14: #{tpu_custom_call.1} parent=1 // pred_check
      _
    $region15: #{tpu_custom_call.1} parent=1 // pred_check_branch
      %37 = sbr.rel (0) target = $region17
    $region16: #{tpu_custom_call.1} parent=1 // pred_region
      %s39 = ssub.s32 512, 512
      %40 = vsyncadd [#allocation6], %s39
      %s41 = sshll.u32 [#allocation5], 4
      %s42 = int_to_ptr.vmem [resolvable:$true] %s41
      %47 = dma.hbm_to_vmem [thread:$0]  %s3, 512, %s42, [#allocation6], 128, 128, 8
    $region17: #{tpu_custom_call.1} parent=1 // pred_fallthru
      _
    // Predicated region
    $region18: #{tpu_custom_call.1} parent=1 // pred_check
      _
    $region19: #{tpu_custom_call.1} parent=1 // pred_check_branch
      %49 = sbr.rel (0) target = $region21
    $region20: #{tpu_custom_call.1} parent=1 // pred_region
      _
    $region21: #{tpu_custom_call.1} parent=1 // pred_fallthru
      _
    // Predicated region
    $region22: #{tpu_custom_call.1} parent=1 // pred_check
      _
    $region23: #{tpu_custom_call.1} parent=1 // pred_check_branch
      %51 = sbr.rel (0) target = $region25
    $region24: #{tpu_custom_call.1} parent=1 // pred_region
      %s53 = ssub.s32 512, 512
      %54 = vsyncadd [#allocation6], %s53
      %s55 = sshll.u32 [#allocation7], 4
      %s56 = int_to_ptr.vmem [resolvable:$true] %s55
      %61 = dma.hbm_to_vmem [thread:$0]  %s5, 512, %s56, [#allocation6], 128, 128, 8
    $region25: #{tpu_custom_call.1} parent=1 // pred_fallthru
      _
    // Predicated region
    $region26: #{tpu_custom_call.1} parent=1 // pred_check
      _
    $region27: #{tpu_custom_call.1} parent=1 // pred_check_branch
      %63 = sbr.rel (0) target = $region29
    $region28: #{tpu_custom_call.1} parent=1 // pred_region
      _
    $region29: #{tpu_custom_call.1} parent=1 // pred_fallthru
      _
    // Predicated region
    $region30: #{tpu_custom_call.1} parent=1 // pred_check
      _
    $region31: #{tpu_custom_call.1} parent=1 // pred_check_branch
      %65 = sbr.rel (0) target = $region33
    $region32: #{tpu_custom_call.1} parent=1 // pred_region
      _
    $region33: #{tpu_custom_call.1} parent=1 // pred_fallthru
      _
    // Predicated region
    $region34: #{tpu_custom_call.1} parent=1 // pred_check
      _
    $region35: #{tpu_custom_call.1} parent=1 // pred_check_branch
      %67 = sbr.rel (0) target = $region37
    $region36: #{tpu_custom_call.1} parent=1 // pred_region
      _
    $region37: #{tpu_custom_call.1} parent=1 // pred_fallthru
      _
    // Predicated region
    $region38: #{tpu_custom_call.1} parent=1 // pred_check
      _
    $region39: #{tpu_custom_call.1} parent=1 // pred_check_branch
      %69 = sbr.rel (0) target = $region41
    $region40: #{tpu_custom_call.1} parent=1 // pred_region
      %70 = dma.done [#allocation3], 512
    $region41: #{tpu_custom_call.1} parent=1 // pred_fallthru
      _
    // Predicated region
    $region42: #{tpu_custom_call.1} parent=1 // pred_check
      _
    $region43: #{tpu_custom_call.1} parent=1 // pred_check_branch
      %72 = sbr.rel (0) target = $region45
    $region44: #{tpu_custom_call.1} parent=1 // pred_region
      %73 = dma.done [#allocation6], 512
    $region45: #{tpu_custom_call.1} parent=1 // pred_fallthru
      _
    // Predicated region
    $region46: #{tpu_custom_call.1} parent=1 // pred_check
      _
    $region47: #{tpu_custom_call.1} parent=1 // pred_check_branch
      %75 = sbr.rel (0) target = $region49
    $region48: #{tpu_custom_call.1} parent=1 // pred_region
      %76 = dma.done [#allocation6], 512
    $region49: #{tpu_custom_call.1} parent=1 // pred_fallthru
      _
    %v77 = vld [vmem:[#allocation2] sm:$0xff]
    %v78 = vld [vmem:[#allocation2 + $0x8] sm:$0xff]
    %v79 = vld [vmem:[#allocation2 + $0x10] sm:$0xff]
    %v80 = vld [vmem:[#allocation2 + $0x18] sm:$0xff]
    %v81 = vld [vmem:[#allocation5] sm:$0xff]
    %v82 = vld [vmem:[#allocation5 + $0x8] sm:$0xff]
    %v83 = vld [vmem:[#allocation5 + $0x10] sm:$0xff]
    %v84 = vld [vmem:[#allocation5 + $0x18] sm:$0xff]
    %v85 = vld [vmem:[%s4] sm:$0xff]
    %v86 = vld [vmem:[%s4 + $0x8] sm:$0xff]
    %v87 = vld [vmem:[%s4 + $0x10] sm:$0xff]
    %v88 = vld [vmem:[%s4 + $0x18] sm:$0xff]
    %v89 = vld [vmem:[#allocation7] sm:$0xff]
    %v90 = vld [vmem:[#allocation7 + $0x8] sm:$0xff]
    %v91 = vld [vmem:[#allocation7 + $0x10] sm:$0xff]
    %v92 = vld [vmem:[#allocation7 + $0x18] sm:$0xff]
    %v93 = vld [vmem:[%s6] sm:$0xff]
    %v94 = vld [vmem:[%s6 + $0x8] sm:$0xff]
    %v95 = vld [vmem:[%s6 + $0x10] sm:$0xff]
    %v96 = vld [vmem:[%s6 + $0x18] sm:$0xff]
    %v97 = vld [vmem:[%s7] sm:$0x3]
    %v98 = vld [vmem:[%s8] sm:$0x3]
    %v99 = vld [vmem:[%s0] sm:$0xff]
    %v100 = vld [vmem:[%s0 + $0x8] sm:$0xff]
    %v101 = vld [vmem:[%s0 + $0x10] sm:$0xff]
    %v102 = vld [vmem:[%s0 + $0x18] sm:$0xff]
    %v103 = vld [vmem:[%s0 + $0x20] sm:$0xff]
    %v104 = vld [vmem:[%s0 + $0x28] sm:$0xff]
    %v105 = vld [vmem:[%s0 + $0x30] sm:$0xff]
    %v106 = vld [vmem:[%s0 + $0x38] sm:$0xff]
    %v107 = vld [vmem:[%s1] sm:$0xff]
    %v108 = vld [vmem:[%s1 + $0x8] sm:$0xff]
    %v109 = vld [vmem:[%s1 + $0x10] sm:$0xff]
    %v110 = vld [vmem:[%s1 + $0x18] sm:$0xff]
    %112 = vset.pattern.permute.xlu0 0
    %113 = vperm.xlu0 %112, %v107
    %v114 = vpop.permute.xlu0 %113
    %117 = vset.pattern.permute.xlu0 0
    %118 = vperm.xlu0 %117, %v108
    %v119 = vpop.permute.xlu0 %118
    %122 = vset.pattern.permute.xlu0 0
    %123 = vperm.xlu0 %122, %v109
    %v124 = vpop.permute.xlu0 %123
    %127 = vset.pattern.permute.xlu0 0
    %128 = vperm.xlu0 %127, %v110
    %v129 = vpop.permute.xlu0 %128
    %vm131 = vcmask 261120
    %v133 = vsel %vm131, %v77, 0
    %v136 = vsel %vm131, %v78, 0
    %v139 = vsel %vm131, %v79, 0
    %v142 = vsel %vm131, %v80, 0
    %144 = vmatprep.subr.mxu0 0.0
    %145 = vmatpush1.msra.mxu0 0.0
    %146 = vmatprep.subr.mxu0 0.0
    %147 = vmatpush1.msra.mxu0 0.0
    %148 = vmatprep.subr.mxu0 0.0
    %149 = vmatpush1.msra.mxu0 0.0
    %150 = vmatprep.subr.mxu0 0.0
    %151 = vmatpush1.msra.mxu0 0.0
    %152 = vmatprep.subr.mxu0 0.0
    %153 = vmatpush1.msra.mxu0 0.0
    %154 = vmatprep.subr.mxu0 0.0
    %155 = vmatpush1.msra.mxu0 0.0
    %156 = vmatprep.subr.mxu0 0.0
    %157 = vmatpush1.msra.mxu0 0.0
    %158 = vmatprep.subr.mxu0 0.0
    %159 = vmatpush1.msra.mxu0 0.0
    %160 = vmatprep.subr.mxu0 0.0
    %161 = vmatpush1.msra.mxu0 0.0
    %162 = vmatprep.subr.mxu0 0.0
    %163 = vmatpush1.msra.mxu0 0.0
    %164 = vmatprep.subr.mxu0 0.0
    %165 = vmatpush1.msra.mxu0 0.0
    %166 = vmatprep.subr.mxu0 0.0
    %167 = vmatpush1.msra.mxu0 0.0
    %168 = vmatprep.subr.mxu0 %v106
    %169 = vmatpush1.msra.mxu0 %v105
    %170 = vmatprep.subr.mxu0 %v104
    %171 = vmatpush1.msra.mxu0 %v103
    %172 = vmatprep.subr.mxu0 %v102
    %173 = vmatpush1.msra.mxu0 %v101
    %174 = vmatprep.subr.mxu0 %v100
    %175 = vmatpush1.msra.mxu0 %v99
    %176 = vmatprep.subr.mxu0 0.0
    %177 = vmatpush2.msra.mxu0 0.0
    %178 = vmatprep.subr.mxu0 0.0
    %179 = vmatpush2.msra.mxu0 0.0
    %180 = vmatprep.subr.mxu0 0.0
    %181 = vmatpush2.msra.mxu0 0.0
    %182 = vmatprep.subr.mxu0 0.0
    %183 = vmatpush2.msra.mxu0 0.0
    %184 = vmatprep.subr.mxu0 0.0
    %185 = vmatpush2.msra.mxu0 0.0
    %186 = vmatprep.subr.mxu0 0.0
    %187 = vmatpush2.msra.mxu0 0.0
    %188 = vmatprep.subr.mxu0 0.0
    %189 = vmatpush2.msra.mxu0 0.0
    %190 = vmatprep.subr.mxu0 0.0
    %191 = vmatpush2.msra.mxu0 0.0
    %192 = vmatprep.subr.mxu0 0.0
    %193 = vmatpush2.msra.mxu0 0.0
    %194 = vmatprep.subr.mxu0 0.0
    %195 = vmatpush2.msra.mxu0 0.0
    %196 = vmatprep.subr.mxu0 0.0
    %197 = vmatpush2.msra.mxu0 0.0
    %198 = vmatprep.subr.mxu0 0.0
    %199 = vmatpush2.msra.mxu0 0.0
    %200 = vmatprep.subr.mxu0 0.0
    %201 = vmatpush2.msra.mxu0 0.0
    %202 = vmatprep.subr.mxu0 0.0
    %203 = vmatpush2.msra.mxu0 0.0
    %204 = vmatprep.subr.mxu0 0.0
    %205 = vmatpush2.msra.mxu0 0.0
    %206 = vmatprep.subr.mxu0 0.0
    %207 = vmatpush2.msra.mxu0 0.0
    %208 = vmatprep.mubr.f32.mxu0 0.0
    %209 = vmatmul.mubr.f32.gmra.mxu0 %v133
    %v210 = vpop.f32.mrf.mxu0
    %v211 = vadd.f32 %v114, %v210
    %v212 = vpop.f32.mrf.mxu0
    %v213 = vadd.f32 %v114, %v212
    %214 = vmatprep.mubr.f32.mxu0 0.0
    %215 = vmatmul.mubr.f32.gmra.mxu0 %v136
    %v216 = vpop.f32.mrf.mxu0
    %v217 = vadd.f32 %v119, %v216
    %v218 = vpop.f32.mrf.mxu0
    %v219 = vadd.f32 %v119, %v218
    %220 = vmatprep.mubr.f32.mxu0 0.0
    %221 = vmatmul.mubr.f32.gmra.mxu0 %v139
    %v222 = vpop.f32.mrf.mxu0
    %v223 = vadd.f32 %v124, %v222
    %v224 = vpop.f32.mrf.mxu0
    %v225 = vadd.f32 %v124, %v224
    %226 = vmatprep.mubr.f32.mxu0 0.0
    %227 = vmatmul.mubr.f32.gmra.mxu0 %v142
    %v228 = vpop.f32.mrf.mxu0
    %v229 = vadd.f32 %v129, %v228
    %v230 = vpop.f32.mrf.mxu0
    %v231 = vadd.f32 %v129, %v230
    %232 = vdwg.mxu0
    %v233 = vmax.f32 %v211, 0.0
    %v234 = vmax.f32 %v213, 0.0
    %v235 = vmax.f32 %v217, 0.0
    %v236 = vmax.f32 %v219, 0.0
    %v237 = vmax.f32 %v223, 0.0
    %v238 = vmax.f32 %v225, 0.0
    %v239 = vmax.f32 %v229, 0.0
    %v240 = vmax.f32 %v231, 0.0
    %242 = vset.pattern.permute.xlu0 0
    %243 = vperm.xlu0 %242, %v85
    %v244 = vpop.permute.xlu0 %243
    %247 = vset.pattern.permute.xlu0 0
    %248 = vperm.xlu0 %247, %v86
    %v249 = vpop.permute.xlu0 %248
    %252 = vset.pattern.permute.xlu0 0
    %253 = vperm.xlu0 %252, %v87
    %v254 = vpop.permute.xlu0 %253
    %257 = vset.pattern.permute.xlu0 0
    %258 = vperm.xlu0 %257, %v88
    %v259 = vpop.permute.xlu0 %258
    %v262 = vsel %vm131, %v81, 0
    %v265 = vsel %vm131, %v82, 0
    %v268 = vsel %vm131, %v83, 0
    %v271 = vsel %vm131, %v84, 0
    %273 = vmatprep.subr.mxu0 0.0
    %274 = vmatpush1.msra.mxu0 0.0
    %275 = vmatprep.subr.mxu0 0.0
    %276 = vmatpush1.msra.mxu0 0.0
    %277 = vmatprep.subr.mxu0 0.0
    %278 = vmatpush1.msra.mxu0 0.0
    %279 = vmatprep.subr.mxu0 0.0
    %280 = vmatpush1.msra.mxu0 0.0
    %281 = vmatprep.subr.mxu0 0.0
    %282 = vmatpush1.msra.mxu0 0.0
    %283 = vmatprep.subr.mxu0 0.0
    %284 = vmatpush1.msra.mxu0 0.0
    %285 = vmatprep.subr.mxu0 0.0
    %286 = vmatpush1.msra.mxu0 0.0
    %287 = vmatprep.subr.mxu0 0.0
    %288 = vmatpush1.msra.mxu0 0.0
    %289 = vmatprep.subr.mxu0 0.0
    %290 = vmatpush1.msra.mxu0 0.0
    %291 = vmatprep.subr.mxu0 0.0
    %292 = vmatpush1.msra.mxu0 0.0
    %293 = vmatprep.subr.mxu0 0.0
    %294 = vmatpush1.msra.mxu0 0.0
    %295 = vmatprep.subr.mxu0 0.0
    %296 = vmatpush1.msra.mxu0 0.0
    %297 = vmatprep.subr.mxu0 %v240
    %298 = vmatpush1.msra.mxu0 %v239
    %299 = vmatprep.subr.mxu0 %v238
    %300 = vmatpush1.msra.mxu0 %v237
    %301 = vmatprep.subr.mxu0 %v236
    %302 = vmatpush1.msra.mxu0 %v235
    %303 = vmatprep.subr.mxu0 %v234
    %304 = vmatpush1.msra.mxu0 %v233
    %305 = vmatprep.subr.mxu0 0.0
    %306 = vmatpush2.msra.mxu0 0.0
    %307 = vmatprep.subr.mxu0 0.0
    %308 = vmatpush2.msra.mxu0 0.0
    %309 = vmatprep.subr.mxu0 0.0
    %310 = vmatpush2.msra.mxu0 0.0
    %311 = vmatprep.subr.mxu0 0.0
    %312 = vmatpush2.msra.mxu0 0.0
    %313 = vmatprep.subr.mxu0 0.0
    %314 = vmatpush2.msra.mxu0 0.0
    %315 = vmatprep.subr.mxu0 0.0
    %316 = vmatpush2.msra.mxu0 0.0
    %317 = vmatprep.subr.mxu0 0.0
    %318 = vmatpush2.msra.mxu0 0.0
    %319 = vmatprep.subr.mxu0 0.0
    %320 = vmatpush2.msra.mxu0 0.0
    %321 = vmatprep.subr.mxu0 0.0
    %322 = vmatpush2.msra.mxu0 0.0
    %323 = vmatprep.subr.mxu0 0.0
    %324 = vmatpush2.msra.mxu0 0.0
    %325 = vmatprep.subr.mxu0 0.0
    %326 = vmatpush2.msra.mxu0 0.0
    %327 = vmatprep.subr.mxu0 0.0
    %328 = vmatpush2.msra.mxu0 0.0
    %329 = vmatprep.subr.mxu0 0.0
    %330 = vmatpush2.msra.mxu0 0.0
    %331 = vmatprep.subr.mxu0 0.0
    %332 = vmatpush2.msra.mxu0 0.0
    %333 = vmatprep.subr.mxu0 0.0
    %334 = vmatpush2.msra.mxu0 0.0
    %335 = vmatprep.subr.mxu0 0.0
    %336 = vmatpush2.msra.mxu0 0.0
    %337 = vmatprep.mubr.f32.mxu0 0.0
    %338 = vmatmul.mubr.f32.gmra.mxu0 %v262
    %v339 = vpop.f32.mrf.mxu0
    %v340 = vadd.f32 %v244, %v339
    %v341 = vpop.f32.mrf.mxu0
    %v342 = vadd.f32 %v244, %v341
    %343 = vmatprep.mubr.f32.mxu0 0.0
    %344 = vmatmul.mubr.f32.gmra.mxu0 %v265
    %v345 = vpop.f32.mrf.mxu0
    %v346 = vadd.f32 %v249, %v345
    %v347 = vpop.f32.mrf.mxu0
    %v348 = vadd.f32 %v249, %v347
    %349 = vmatprep.mubr.f32.mxu0 0.0
    %350 = vmatmul.mubr.f32.gmra.mxu0 %v268
    %v351 = vpop.f32.mrf.mxu0
    %v352 = vadd.f32 %v254, %v351
    %v353 = vpop.f32.mrf.mxu0
    %v354 = vadd.f32 %v254, %v353
    %355 = vmatprep.mubr.f32.mxu0 0.0
    %356 = vmatmul.mubr.f32.gmra.mxu0 %v271
    %v357 = vpop.f32.mrf.mxu0
    %v358 = vadd.f32 %v259, %v357
    %v359 = vpop.f32.mrf.mxu0
    %v360 = vadd.f32 %v259, %v359
    %361 = vdwg.mxu0
    %v362 = vmax.f32 %v340, 0.0
    %v363 = vmax.f32 %v342, 0.0
    %v364 = vmax.f32 %v346, 0.0
    %v365 = vmax.f32 %v348, 0.0
    %v366 = vmax.f32 %v352, 0.0
    %v367 = vmax.f32 %v354, 0.0
    %v368 = vmax.f32 %v358, 0.0
    %v369 = vmax.f32 %v360, 0.0
    %371 = vset.pattern.permute.xlu0 0
    %372 = vperm.xlu0 %371, %v93
    %v373 = vpop.permute.xlu0 %372
    %376 = vset.pattern.permute.xlu0 0
    %377 = vperm.xlu0 %376, %v94
    %v378 = vpop.permute.xlu0 %377
    %381 = vset.pattern.permute.xlu0 0
    %382 = vperm.xlu0 %381, %v95
    %v383 = vpop.permute.xlu0 %382
    %386 = vset.pattern.permute.xlu0 0
    %387 = vperm.xlu0 %386, %v96
    %v388 = vpop.permute.xlu0 %387
    %v391 = vsel %vm131, %v89, 0
    %v394 = vsel %vm131, %v90, 0
    %v397 = vsel %vm131, %v91, 0
    %v400 = vsel %vm131, %v92, 0
    %402 = vmatprep.subr.mxu0 0.0
    %403 = vmatpush1.msra.mxu0 0.0
    %404 = vmatprep.subr.mxu0 0.0
    %405 = vmatpush1.msra.mxu0 0.0
    %406 = vmatprep.subr.mxu0 0.0
    %407 = vmatpush1.msra.mxu0 0.0
    %408 = vmatprep.subr.mxu0 0.0
    %409 = vmatpush1.msra.mxu0 0.0
    %410 = vmatprep.subr.mxu0 0.0
    %411 = vmatpush1.msra.mxu0 0.0
    %412 = vmatprep.subr.mxu0 0.0
    %413 = vmatpush1.msra.mxu0 0.0
    %414 = vmatprep.subr.mxu0 0.0
    %415 = vmatpush1.msra.mxu0 0.0
    %416 = vmatprep.subr.mxu0 0.0
    %417 = vmatpush1.msra.mxu0 0.0
    %418 = vmatprep.subr.mxu0 0.0
    %419 = vmatpush1.msra.mxu0 0.0
    %420 = vmatprep.subr.mxu0 0.0
    %421 = vmatpush1.msra.mxu0 0.0
    %422 = vmatprep.subr.mxu0 0.0
    %423 = vmatpush1.msra.mxu0 0.0
    %424 = vmatprep.subr.mxu0 0.0
    %425 = vmatpush1.msra.mxu0 0.0
    %426 = vmatprep.subr.mxu0 %v369
    %427 = vmatpush1.msra.mxu0 %v368
    %428 = vmatprep.subr.mxu0 %v367
    %429 = vmatpush1.msra.mxu0 %v366
    %430 = vmatprep.subr.mxu0 %v365
    %431 = vmatpush1.msra.mxu0 %v364
    %432 = vmatprep.subr.mxu0 %v363
    %433 = vmatpush1.msra.mxu0 %v362
    %434 = vmatprep.subr.mxu0 0.0
    %435 = vmatpush2.msra.mxu0 0.0
    %436 = vmatprep.subr.mxu0 0.0
    %437 = vmatpush2.msra.mxu0 0.0
    %438 = vmatprep.subr.mxu0 0.0
    %439 = vmatpush2.msra.mxu0 0.0
    %440 = vmatprep.subr.mxu0 0.0
    %441 = vmatpush2.msra.mxu0 0.0
    %442 = vmatprep.subr.mxu0 0.0
    %443 = vmatpush2.msra.mxu0 0.0
    %444 = vmatprep.subr.mxu0 0.0
    %445 = vmatpush2.msra.mxu0 0.0
    %446 = vmatprep.subr.mxu0 0.0
    %447 = vmatpush2.msra.mxu0 0.0
    %448 = vmatprep.subr.mxu0 0.0
    %449 = vmatpush2.msra.mxu0 0.0
    %450 = vmatprep.subr.mxu0 0.0
    %451 = vmatpush2.msra.mxu0 0.0
    %452 = vmatprep.subr.mxu0 0.0
    %453 = vmatpush2.msra.mxu0 0.0
    %454 = vmatprep.subr.mxu0 0.0
    %455 = vmatpush2.msra.mxu0 0.0
    %456 = vmatprep.subr.mxu0 0.0
    %457 = vmatpush2.msra.mxu0 0.0
    %458 = vmatprep.subr.mxu0 0.0
    %459 = vmatpush2.msra.mxu0 0.0
    %460 = vmatprep.subr.mxu0 0.0
    %461 = vmatpush2.msra.mxu0 0.0
    %462 = vmatprep.subr.mxu0 0.0
    %463 = vmatpush2.msra.mxu0 0.0
    %464 = vmatprep.subr.mxu0 0.0
    %465 = vmatpush2.msra.mxu0 0.0
    %466 = vmatprep.mubr.f32.mxu0 0.0
    %467 = vmatmul.mubr.f32.gmra.mxu0 %v391
    %v468 = vpop.f32.mrf.mxu0
    %v469 = vadd.f32 %v373, %v468
    %v470 = vpop.f32.mrf.mxu0
    %v471 = vadd.f32 %v373, %v470
    %472 = vmatprep.mubr.f32.mxu0 0.0
    %473 = vmatmul.mubr.f32.gmra.mxu0 %v394
    %v474 = vpop.f32.mrf.mxu0
    %v475 = vadd.f32 %v378, %v474
    %v476 = vpop.f32.mrf.mxu0
    %v477 = vadd.f32 %v378, %v476
    %478 = vmatprep.mubr.f32.mxu0 0.0
    %479 = vmatmul.mubr.f32.gmra.mxu0 %v397
    %v480 = vpop.f32.mrf.mxu0
    %v481 = vadd.f32 %v383, %v480
    %v482 = vpop.f32.mrf.mxu0
    %v483 = vadd.f32 %v383, %v482
    %484 = vmatprep.mubr.f32.mxu0 0.0
    %485 = vmatmul.mubr.f32.gmra.mxu0 %v400
    %v486 = vpop.f32.mrf.mxu0
    %v487 = vadd.f32 %v388, %v486
    %v488 = vpop.f32.mrf.mxu0
    %v489 = vadd.f32 %v388, %v488
    %490 = vdwg.mxu0
    %v491 = vmax.f32 %v469, 0.0
    %v492 = vmax.f32 %v471, 0.0
    %v493 = vmax.f32 %v475, 0.0
    %v494 = vmax.f32 %v477, 0.0
    %v495 = vmax.f32 %v481, 0.0
    %v496 = vmax.f32 %v483, 0.0
    %v497 = vmax.f32 %v487, 0.0
    %v498 = vmax.f32 %v489, 0.0
    %499 = vst [vmem:[#allocation9] sm:$0xff] %v491
    %500 = vst [vmem:[#allocation9 + $0x8] sm:$0xff] %v492
    %501 = vst [vmem:[#allocation9 + $0x10] sm:$0xff] %v493
    %502 = vst [vmem:[#allocation9 + $0x18] sm:$0xff] %v494
    %503 = vst [vmem:[#allocation9 + $0x20] sm:$0xff] %v495
    %504 = vst [vmem:[#allocation9 + $0x28] sm:$0xff] %v496
    %505 = vst [vmem:[#allocation9 + $0x30] sm:$0xff] %v497
    %506 = vst [vmem:[#allocation9 + $0x38] sm:$0xff] %v498
    %508 = vset.pattern.permute.xlu0 0
    %509 = vperm.xlu0 %508, %v98
    %v510 = vpop.permute.xlu0 %509
    %v513 = vsel %vm131, %v97, 0
    %515 = vmatprep.subr.mxu0 0.0
    %516 = vmatpush1.msra.mxu0 0.0
    %517 = vmatprep.subr.mxu0 0.0
    %518 = vmatpush1.msra.mxu0 0.0
    %519 = vmatprep.subr.mxu0 0.0
    %520 = vmatpush1.msra.mxu0 0.0
    %521 = vmatprep.subr.mxu0 0.0
    %522 = vmatpush1.msra.mxu0 0.0
    %523 = vmatprep.subr.mxu0 0.0
    %524 = vmatpush1.msra.mxu0 0.0
    %525 = vmatprep.subr.mxu0 0.0
    %526 = vmatpush1.msra.mxu0 0.0
    %527 = vmatprep.subr.mxu0 0.0
    %528 = vmatpush1.msra.mxu0 0.0
    %529 = vmatprep.subr.mxu0 0.0
    %530 = vmatpush1.msra.mxu0 0.0
    %531 = vmatprep.subr.mxu0 0.0
    %532 = vmatpush1.msra.mxu0 0.0
    %533 = vmatprep.subr.mxu0 0.0
    %534 = vmatpush1.msra.mxu0 0.0
    %535 = vmatprep.subr.mxu0 0.0
    %536 = vmatpush1.msra.mxu0 0.0
    %537 = vmatprep.subr.mxu0 0.0
    %538 = vmatpush1.msra.mxu0 0.0
    %539 = vmatprep.subr.mxu0 %v498
    %540 = vmatpush1.msra.mxu0 %v497
    %541 = vmatprep.subr.mxu0 %v496
    %542 = vmatpush1.msra.mxu0 %v495
    %543 = vmatprep.subr.mxu0 %v494
    %544 = vmatpush1.msra.mxu0 %v493
    %545 = vmatprep.subr.mxu0 %v492
    %546 = vmatpush1.msra.mxu0 %v491
    %547 = vmatprep.subr.mxu0 0.0
    %548 = vmatpush2.msra.mxu0 0.0
    %549 = vmatprep.subr.mxu0 0.0
    %550 = vmatpush2.msra.mxu0 0.0
    %551 = vmatprep.subr.mxu0 0.0
    %552 = vmatpush2.msra.mxu0 0.0
    %553 = vmatprep.subr.mxu0 0.0
    %554 = vmatpush2.msra.mxu0 0.0
    %555 = vmatprep.subr.mxu0 0.0
    %556 = vmatpush2.msra.mxu0 0.0
    %557 = vmatprep.subr.mxu0 0.0
    %558 = vmatpush2.msra.mxu0 0.0
    %559 = vmatprep.subr.mxu0 0.0
    %560 = vmatpush2.msra.mxu0 0.0
    %561 = vmatprep.subr.mxu0 0.0
    %562 = vmatpush2.msra.mxu0 0.0
    %563 = vmatprep.subr.mxu0 0.0
    %564 = vmatpush2.msra.mxu0 0.0
    %565 = vmatprep.subr.mxu0 0.0
    %566 = vmatpush2.msra.mxu0 0.0
    %567 = vmatprep.subr.mxu0 0.0
    %568 = vmatpush2.msra.mxu0 0.0
    %569 = vmatprep.subr.mxu0 0.0
    %570 = vmatpush2.msra.mxu0 0.0
    %571 = vmatprep.subr.mxu0 0.0
    %572 = vmatpush2.msra.mxu0 0.0
    %573 = vmatprep.subr.mxu0 0.0
    %574 = vmatpush2.msra.mxu0 0.0
    %575 = vmatprep.subr.mxu0 0.0
    %576 = vmatpush2.msra.mxu0 0.0
    %577 = vmatprep.subr.mxu0 0.0
    %578 = vmatpush2.msra.mxu0 0.0
    %579 = vmatprep.mubr.f32.mxu0 0.0
    %580 = vmatmul.mubr.f32.gmra.mxu0 %v513
    %v581 = vpop.f32.mrf.mxu0
    %v582 = vadd.f32 %v510, %v581
    %v583 = vpop.f32.mrf.mxu0
    %v584 = vadd.f32 %v510, %v583
    %585 = vdwg.mxu0
    %v588 = vcombine.low %v582, %v584
    %v590 = vunpack.c.l.s4 1983009808
    %v591 = vunpack.c.0.s8 %v590
    %v592 = vlaneseq
    %v593 = vshrl.u32 %v592, 7
    %v594 = vsub.s32 %v591, %v593
    %v595 = vrot.slane %v588, %v594
    %597 = vst [vmem:[#allocation8] sm:$0xf] %v595
    %s598 = scalar_lea.vmem %s0, 64
    %v599 = vld [vmem:[%s598] sm:$0xff]
    %v600 = vld [vmem:[%s598 + $0x8] sm:$0xff]
    %v601 = vld [vmem:[%s598 + $0x10] sm:$0xff]
    %v602 = vld [vmem:[%s598 + $0x18] sm:$0xff]
    %v603 = vld [vmem:[%s598 + $0x20] sm:$0xff]
    %v604 = vld [vmem:[%s598 + $0x28] sm:$0xff]
    %v605 = vld [vmem:[%s598 + $0x30] sm:$0xff]
    %v606 = vld [vmem:[%s598 + $0x38] sm:$0xff]
    %s607 = scalar_lea.vmem %s1, 32
    %v608 = vld [vmem:[%s607] sm:$0xff]
    %v609 = vld [vmem:[%s607 + $0x8] sm:$0xff]
    %v610 = vld [vmem:[%s607 + $0x10] sm:$0xff]
    %v611 = vld [vmem:[%s607 + $0x18] sm:$0xff]
    %613 = vset.pattern.permute.xlu0 0
    %614 = vperm.xlu0 %613, %v608
    %v615 = vpop.permute.xlu0 %614
    %618 = vset.pattern.permute.xlu0 0
    %619 = vperm.xlu0 %618, %v609
    %v620 = vpop.permute.xlu0 %619
    %623 = vset.pattern.permute.xlu0 0
    %624 = vperm.xlu0 %623, %v610
    %v625 = vpop.permute.xlu0 %624
    %628 = vset.pattern.permute.xlu0 0
    %629 = vperm.xlu0 %628, %v611
    %v630 = vpop.permute.xlu0 %629
    %632 = vmatprep.subr.mxu0 0.0
    %633 = vmatpush1.msra.mxu0 0.0
    %634 = vmatprep.subr.mxu0 0.0
    %635 = vmatpush1.msra.mxu0 0.0
    %636 = vmatprep.subr.mxu0 0.0
    %637 = vmatpush1.msra.mxu0 0.0
    %638 = vmatprep.subr.mxu0 0.0
    %639 = vmatpush1.msra.mxu0 0.0
    %640 = vmatprep.subr.mxu0 0.0
    %641 = vmatpush1.msra.mxu0 0.0
    %642 = vmatprep.subr.mxu0 0.0
    %643 = vmatpush1.msra.mxu0 0.0
    %644 = vmatprep.subr.mxu0 0.0
    %645 = vmatpush1.msra.mxu0 0.0
    %646 = vmatprep.subr.mxu0 0.0
    %647 = vmatpush1.msra.mxu0 0.0
    %648 = vmatprep.subr.mxu0 0.0
    %649 = vmatpush1.msra.mxu0 0.0
    %650 = vmatprep.subr.mxu0 0.0
    %651 = vmatpush1.msra.mxu0 0.0
    %652 = vmatprep.subr.mxu0 0.0
    %653 = vmatpush1.msra.mxu0 0.0
    %654 = vmatprep.subr.mxu0 0.0
    %655 = vmatpush1.msra.mxu0 0.0
    %656 = vmatprep.subr.mxu0 %v606
    %657 = vmatpush1.msra.mxu0 %v605
    %658 = vmatprep.subr.mxu0 %v604
    %659 = vmatpush1.msra.mxu0 %v603
    %660 = vmatprep.subr.mxu0 %v602
    %661 = vmatpush1.msra.mxu0 %v601
    %662 = vmatprep.subr.mxu0 %v600
    %663 = vmatpush1.msra.mxu0 %v599
    %664 = vmatprep.subr.mxu0 0.0
    %665 = vmatpush2.msra.mxu0 0.0
    %666 = vmatprep.subr.mxu0 0.0
    %667 = vmatpush2.msra.mxu0 0.0
    %668 = vmatprep.subr.mxu0 0.0
    %669 = vmatpush2.msra.mxu0 0.0
    %670 = vmatprep.subr.mxu0 0.0
    %671 = vmatpush2.msra.mxu0 0.0
    %672 = vmatprep.subr.mxu0 0.0
    %673 = vmatpush2.msra.mxu0 0.0
    %674 = vmatprep.subr.mxu0 0.0
    %675 = vmatpush2.msra.mxu0 0.0
    %676 = vmatprep.subr.mxu0 0.0
    %677 = vmatpush2.msra.mxu0 0.0
    %678 = vmatprep.subr.mxu0 0.0
    %679 = vmatpush2.msra.mxu0 0.0
    %680 = vmatprep.subr.mxu0 0.0
    %681 = vmatpush2.msra.mxu0 0.0
    %682 = vmatprep.subr.mxu0 0.0
    %683 = vmatpush2.msra.mxu0 0.0
    %684 = vmatprep.subr.mxu0 0.0
    %685 = vmatpush2.msra.mxu0 0.0
    %686 = vmatprep.subr.mxu0 0.0
    %687 = vmatpush2.msra.mxu0 0.0
    %688 = vmatprep.subr.mxu0 0.0
    %689 = vmatpush2.msra.mxu0 0.0
    %690 = vmatprep.subr.mxu0 0.0
    %691 = vmatpush2.msra.mxu0 0.0
    %692 = vmatprep.subr.mxu0 0.0
    %693 = vmatpush2.msra.mxu0 0.0
    %694 = vmatprep.subr.mxu0 0.0
    %695 = vmatpush2.msra.mxu0 0.0
    %696 = vmatprep.mubr.f32.mxu0 0.0
    %697 = vmatmul.mubr.f32.gmra.mxu0 %v133
    %v698 = vpop.f32.mrf.mxu0
    %v699 = vadd.f32 %v615, %v698
    %v700 = vpop.f32.mrf.mxu0
    %v701 = vadd.f32 %v615, %v700
    %702 = vmatprep.mubr.f32.mxu0 0.0
    %703 = vmatmul.mubr.f32.gmra.mxu0 %v136
    %v704 = vpop.f32.mrf.mxu0
    %v705 = vadd.f32 %v620, %v704
    %v706 = vpop.f32.mrf.mxu0
    %v707 = vadd.f32 %v620, %v706
    %708 = vmatprep.mubr.f32.mxu0 0.0
    %709 = vmatmul.mubr.f32.gmra.mxu0 %v139
    %v710 = vpop.f32.mrf.mxu0
    %v711 = vadd.f32 %v625, %v710
    %v712 = vpop.f32.mrf.mxu0
    %v713 = vadd.f32 %v625, %v712
    %714 = vmatprep.mubr.f32.mxu0 0.0
    %715 = vmatmul.mubr.f32.gmra.mxu0 %v142
    %v716 = vpop.f32.mrf.mxu0
    %v717 = vadd.f32 %v630, %v716
    %v718 = vpop.f32.mrf.mxu0
    %v719 = vadd.f32 %v630, %v718
    %720 = vdwg.mxu0
    %v721 = vmax.f32 %v699, 0.0
    %v722 = vmax.f32 %v701, 0.0
    %v723 = vmax.f32 %v705, 0.0
    %v724 = vmax.f32 %v707, 0.0
    %v725 = vmax.f32 %v711, 0.0
    %v726 = vmax.f32 %v713, 0.0
    %v727 = vmax.f32 %v717, 0.0
    %v728 = vmax.f32 %v719, 0.0
    %729 = vmatprep.subr.mxu0 0.0
    %730 = vmatpush1.msra.mxu0 0.0
    %731 = vmatprep.subr.mxu0 0.0
    %732 = vmatpush1.msra.mxu0 0.0
    %733 = vmatprep.subr.mxu0 0.0
    %734 = vmatpush1.msra.mxu0 0.0
    %735 = vmatprep.subr.mxu0 0.0
    %736 = vmatpush1.msra.mxu0 0.0
    %737 = vmatprep.subr.mxu0 0.0
    %738 = vmatpush1.msra.mxu0 0.0
    %739 = vmatprep.subr.mxu0 0.0
    %740 = vmatpush1.msra.mxu0 0.0
    %741 = vmatprep.subr.mxu0 0.0
    %742 = vmatpush1.msra.mxu0 0.0
    %743 = vmatprep.subr.mxu0 0.0
    %744 = vmatpush1.msra.mxu0 0.0
    %745 = vmatprep.subr.mxu0 0.0
    %746 = vmatpush1.msra.mxu0 0.0
    %747 = vmatprep.subr.mxu0 0.0
    %748 = vmatpush1.msra.mxu0 0.0
    %749 = vmatprep.subr.mxu0 0.0
    %750 = vmatpush1.msra.mxu0 0.0
    %751 = vmatprep.subr.mxu0 0.0
    %752 = vmatpush1.msra.mxu0 0.0
    %753 = vmatprep.subr.mxu0 %v728
    %754 = vmatpush1.msra.mxu0 %v727
    %755 = vmatprep.subr.mxu0 %v726
    %756 = vmatpush1.msra.mxu0 %v725
    %757 = vmatprep.subr.mxu0 %v724
    %758 = vmatpush1.msra.mxu0 %v723
    %759 = vmatprep.subr.mxu0 %v722
    %760 = vmatpush1.msra.mxu0 %v721
    %761 = vmatprep.subr.mxu0 0.0
    %762 = vmatpush2.msra.mxu0 0.0
    %763 = vmatprep.subr.mxu0 0.0
    %764 = vmatpush2.msra.mxu0 0.0
    %765 = vmatprep.subr.mxu0 0.0
    %766 = vmatpush2.msra.mxu0 0.0
    %767 = vmatprep.subr.mxu0 0.0
    %768 = vmatpush2.msra.mxu0 0.0
    %769 = vmatprep.subr.mxu0 0.0
    %770 = vmatpush2.msra.mxu0 0.0
    %771 = vmatprep.subr.mxu0 0.0
    %772 = vmatpush2.msra.mxu0 0.0
    %773 = vmatprep.subr.mxu0 0.0
    %774 = vmatpush2.msra.mxu0 0.0
    %775 = vmatprep.subr.mxu0 0.0
    %776 = vmatpush2.msra.mxu0 0.0
    %777 = vmatprep.subr.mxu0 0.0
    %778 = vmatpush2.msra.mxu0 0.0
    %779 = vmatprep.subr.mxu0 0.0
    %780 = vmatpush2.msra.mxu0 0.0
    %781 = vmatprep.subr.mxu0 0.0
    %782 = vmatpush2.msra.mxu0 0.0
    %783 = vmatprep.subr.mxu0 0.0
    %784 = vmatpush2.msra.mxu0 0.0
    %785 = vmatprep.subr.mxu0 0.0
    %786 = vmatpush2.msra.mxu0 0.0
    %787 = vmatprep.subr.mxu0 0.0
    %788 = vmatpush2.msra.mxu0 0.0
    %789 = vmatprep.subr.mxu0 0.0
    %790 = vmatpush2.msra.mxu0 0.0
    %791 = vmatprep.subr.mxu0 0.0
    %792 = vmatpush2.msra.mxu0 0.0
    %793 = vmatprep.mubr.f32.mxu0 0.0
    %794 = vmatmul.mubr.f32.gmra.mxu0 %v262
    %v795 = vpop.f32.mrf.mxu0
    %v796 = vadd.f32 %v244, %v795
    %v797 = vpop.f32.mrf.mxu0
    %v798 = vadd.f32 %v244, %v797
    %799 = vmatprep.mubr.f32.mxu0 0.0
    %800 = vmatmul.mubr.f32.gmra.mxu0 %v265
    %v801 = vpop.f32.mrf.mxu0
    %v802 = vadd.f32 %v249, %v801
    %v803 = vpop.f32.mrf.mxu0
    %v804 = vadd.f32 %v249, %v803
    %805 = vmatprep.mubr.f32.mxu0 0.0
    %806 = vmatmul.mubr.f32.gmra.mxu0 %v268
    %v807 = vpop.f32.mrf.mxu0
    %v808 = vadd.f32 %v254, %v807
    %v809 = vpop.f32.mrf.mxu0
    %v810 = vadd.f32 %v254, %v809
    %811 = vmatprep.mubr.f32.mxu0 0.0
    %812 = vmatmul.mubr.f32.gmra.mxu0 %v271
    %v813 = vpop.f32.mrf.mxu0
    %v814 = vadd.f32 %v259, %v813
    %v815 = vpop.f32.mrf.mxu0
    %v816 = vadd.f32 %v259, %v815
    %817 = vdwg.mxu0
    %v818 = vmax.f32 %v796, 0.0
    %v819 = vmax.f32 %v798, 0.0
    %v820 = vmax.f32 %v802, 0.0
    %v821 = vmax.f32 %v804, 0.0
    %v822 = vmax.f32 %v808, 0.0
    %v823 = vmax.f32 %v810, 0.0
    %v824 = vmax.f32 %v814, 0.0
    %v825 = vmax.f32 %v816, 0.0
    %826 = vmatprep.subr.mxu0 0.0
    %827 = vmatpush1.msra.mxu0 0.0
    %828 = vmatprep.subr.mxu0 0.0
    %829 = vmatpush1.msra.mxu0 0.0
    %830 = vmatprep.subr.mxu0 0.0
    %831 = vmatpush1.msra.mxu0 0.0
    %832 = vmatprep.subr.mxu0 0.0
    %833 = vmatpush1.msra.mxu0 0.0
    %834 = vmatprep.subr.mxu0 0.0
    %835 = vmatpush1.msra.mxu0 0.0
    %836 = vmatprep.subr.mxu0 0.0
    %837 = vmatpush1.msra.mxu0 0.0
    %838 = vmatprep.subr.mxu0 0.0
    %839 = vmatpush1.msra.mxu0 0.0
    %840 = vmatprep.subr.mxu0 0.0
    %841 = vmatpush1.msra.mxu0 0.0
    %842 = vmatprep.subr.mxu0 0.0
    %843 = vmatpush1.msra.mxu0 0.0
    %844 = vmatprep.subr.mxu0 0.0
    %845 = vmatpush1.msra.mxu0 0.0
    %846 = vmatprep.subr.mxu0 0.0
    %847 = vmatpush1.msra.mxu0 0.0
    %848 = vmatprep.subr.mxu0 0.0
    %849 = vmatpush1.msra.mxu0 0.0
    %850 = vmatprep.subr.mxu0 %v825
    %851 = vmatpush1.msra.mxu0 %v824
    %852 = vmatprep.subr.mxu0 %v823
    %853 = vmatpush1.msra.mxu0 %v822
    %854 = vmatprep.subr.mxu0 %v821
    %855 = vmatpush1.msra.mxu0 %v820
    %856 = vmatprep.subr.mxu0 %v819
    %857 = vmatpush1.msra.mxu0 %v818
    %858 = vmatprep.subr.mxu0 0.0
    %859 = vmatpush2.msra.mxu0 0.0
    %860 = vmatprep.subr.mxu0 0.0
    %861 = vmatpush2.msra.mxu0 0.0
    %862 = vmatprep.subr.mxu0 0.0
    %863 = vmatpush2.msra.mxu0 0.0
    %864 = vmatprep.subr.mxu0 0.0
    %865 = vmatpush2.msra.mxu0 0.0
    %866 = vmatprep.subr.mxu0 0.0
    %867 = vmatpush2.msra.mxu0 0.0
    %868 = vmatprep.subr.mxu0 0.0
    %869 = vmatpush2.msra.mxu0 0.0
    %870 = vmatprep.subr.mxu0 0.0
    %871 = vmatpush2.msra.mxu0 0.0
    %872 = vmatprep.subr.mxu0 0.0
    %873 = vmatpush2.msra.mxu0 0.0
    %874 = vmatprep.subr.mxu0 0.0
    %875 = vmatpush2.msra.mxu0 0.0
    %876 = vmatprep.subr.mxu0 0.0
    %877 = vmatpush2.msra.mxu0 0.0
    %878 = vmatprep.subr.mxu0 0.0
    %879 = vmatpush2.msra.mxu0 0.0
    %880 = vmatprep.subr.mxu0 0.0
    %881 = vmatpush2.msra.mxu0 0.0
    %882 = vmatprep.subr.mxu0 0.0
    %883 = vmatpush2.msra.mxu0 0.0
    %884 = vmatprep.subr.mxu0 0.0
    %885 = vmatpush2.msra.mxu0 0.0
    %886 = vmatprep.subr.mxu0 0.0
    %887 = vmatpush2.msra.mxu0 0.0
    %888 = vmatprep.subr.mxu0 0.0
    %889 = vmatpush2.msra.mxu0 0.0
    %890 = vmatprep.mubr.f32.mxu0 0.0
    %891 = vmatmul.mubr.f32.gmra.mxu0 %v391
    %v892 = vpop.f32.mrf.mxu0
    %v893 = vadd.f32 %v373, %v892
    %v894 = vpop.f32.mrf.mxu0
    %v895 = vadd.f32 %v373, %v894
    %896 = vmatprep.mubr.f32.mxu0 0.0
    %897 = vmatmul.mubr.f32.gmra.mxu0 %v394
    %v898 = vpop.f32.mrf.mxu0
    %v899 = vadd.f32 %v378, %v898
    %v900 = vpop.f32.mrf.mxu0
    %v901 = vadd.f32 %v378, %v900
    %902 = vmatprep.mubr.f32.mxu0 0.0
    %903 = vmatmul.mubr.f32.gmra.mxu0 %v397
    %v904 = vpop.f32.mrf.mxu0
    %v905 = vadd.f32 %v383, %v904
    %v906 = vpop.f32.mrf.mxu0
    %v907 = vadd.f32 %v383, %v906
    %908 = vmatprep.mubr.f32.mxu0 0.0
    %909 = vmatmul.mubr.f32.gmra.mxu0 %v400
    %v910 = vpop.f32.mrf.mxu0
    %v911 = vadd.f32 %v388, %v910
    %v912 = vpop.f32.mrf.mxu0
    %v913 = vadd.f32 %v388, %v912
    %914 = vdwg.mxu0
    %v915 = vmax.f32 %v893, 0.0
    %v916 = vmax.f32 %v895, 0.0
    %v917 = vmax.f32 %v899, 0.0
    %v918 = vmax.f32 %v901, 0.0
    %v919 = vmax.f32 %v905, 0.0
    %v920 = vmax.f32 %v907, 0.0
    %v921 = vmax.f32 %v911, 0.0
    %v922 = vmax.f32 %v913, 0.0
    %s923 = scalar_lea.vmem [#allocation9], 64
    %924 = vst [vmem:[%s923] sm:$0xff] %v915
    %925 = vst [vmem:[%s923 + $0x8] sm:$0xff] %v916
    %926 = vst [vmem:[%s923 + $0x10] sm:$0xff] %v917
    %927 = vst [vmem:[%s923 + $0x18] sm:$0xff] %v918
    %928 = vst [vmem:[%s923 + $0x20] sm:$0xff] %v919
    %929 = vst [vmem:[%s923 + $0x28] sm:$0xff] %v920
    %930 = vst [vmem:[%s923 + $0x30] sm:$0xff] %v921
    %931 = vst [vmem:[%s923 + $0x38] sm:$0xff] %v922
    %932 = vmatprep.subr.mxu0 0.0
    %933 = vmatpush1.msra.mxu0 0.0
    %934 = vmatprep.subr.mxu0 0.0
    %935 = vmatpush1.msra.mxu0 0.0
    %936 = vmatprep.subr.mxu0 0.0
    %937 = vmatpush1.msra.mxu0 0.0
    %938 = vmatprep.subr.mxu0 0.0
    %939 = vmatpush1.msra.mxu0 0.0
    %940 = vmatprep.subr.mxu0 0.0
    %941 = vmatpush1.msra.mxu0 0.0
    %942 = vmatprep.subr.mxu0 0.0
    %943 = vmatpush1.msra.mxu0 0.0
    %944 = vmatprep.subr.mxu0 0.0
    %945 = vmatpush1.msra.mxu0 0.0
    %946 = vmatprep.subr.mxu0 0.0
    %947 = vmatpush1.msra.mxu0 0.0
    %948 = vmatprep.subr.mxu0 0.0
    %949 = vmatpush1.msra.mxu0 0.0
    %950 = vmatprep.subr.mxu0 0.0
    %951 = vmatpush1.msra.mxu0 0.0
    %952 = vmatprep.subr.mxu0 0.0
    %953 = vmatpush1.msra.mxu0 0.0
    %954 = vmatprep.subr.mxu0 0.0
    %955 = vmatpush1.msra.mxu0 0.0
    %956 = vmatprep.subr.mxu0 %v922
    %957 = vmatpush1.msra.mxu0 %v921
    %958 = vmatprep.subr.mxu0 %v920
    %959 = vmatpush1.msra.mxu0 %v919
    %960 = vmatprep.subr.mxu0 %v918
    %961 = vmatpush1.msra.mxu0 %v917
    %962 = vmatprep.subr.mxu0 %v916
    %963 = vmatpush1.msra.mxu0 %v915
    %964 = vmatprep.subr.mxu0 0.0
    %965 = vmatpush2.msra.mxu0 0.0
    %966 = vmatprep.subr.mxu0 0.0
    %967 = vmatpush2.msra.mxu0 0.0
    %968 = vmatprep.subr.mxu0 0.0
    %969 = vmatpush2.msra.mxu0 0.0
    %970 = vmatprep.subr.mxu0 0.0
    %971 = vmatpush2.msra.mxu0 0.0
    %972 = vmatprep.subr.mxu0 0.0
    %973 = vmatpush2.msra.mxu0 0.0
    %974 = vmatprep.subr.mxu0 0.0
    %975 = vmatpush2.msra.mxu0 0.0
    %976 = vmatprep.subr.mxu0 0.0
    %977 = vmatpush2.msra.mxu0 0.0
    %978 = vmatprep.subr.mxu0 0.0
    %979 = vmatpush2.msra.mxu0 0.0
    %980 = vmatprep.subr.mxu0 0.0
    %981 = vmatpush2.msra.mxu0 0.0
    %982 = vmatprep.subr.mxu0 0.0
    %983 = vmatpush2.msra.mxu0 0.0
    %984 = vmatprep.subr.mxu0 0.0
    %985 = vmatpush2.msra.mxu0 0.0
    %986 = vmatprep.subr.mxu0 0.0
    %987 = vmatpush2.msra.mxu0 0.0
    %988 = vmatprep.subr.mxu0 0.0
    %989 = vmatpush2.msra.mxu0 0.0
    %990 = vmatprep.subr.mxu0 0.0
    %991 = vmatpush2.msra.mxu0 0.0
    %992 = vmatprep.subr.mxu0 0.0
    %993 = vmatpush2.msra.mxu0 0.0
    %994 = vmatprep.subr.mxu0 0.0
    %995 = vmatpush2.msra.mxu0 0.0
    %996 = vmatprep.mubr.f32.mxu0 0.0
    %997 = vmatmul.mubr.f32.gmra.mxu0 %v513
    %v998 = vpop.f32.mrf.mxu0
    %v999 = vadd.f32 %v510, %v998
    %v1000 = vpop.f32.mrf.mxu0
    %v1001 = vadd.f32 %v510, %v1000
    %1002 = vdwg.mxu0
    %v1005 = vcombine.low %v999, %v1001
    %v1007 = vunpack.c.l.s4 1983009808
    %v1008 = vunpack.c.0.s8 %v1007
    %v1009 = vlaneseq
    %v1010 = vshrl.u32 %v1009, 7
    %v1011 = vsub.s32 %v1008, %v1010
    %v1012 = vrot.slane %v1005, %v1011
    %s1014 = scalar_lea.vmem [#allocation8], 4
    %1015 = vst [vmem:[%s1014] sm:$0xf] %v1012
    // Predicated region
    $region50: #{tpu_custom_call.1} parent=1 // pred_check
      _
    $region51: #{tpu_custom_call.1} parent=1 // pred_check_branch
      %1017 = sbr.rel (0) target = $region53
    $region52: #{tpu_custom_call.1} parent=1 // pred_region
      %s1019 = ssub.s32 128, 128
      %1020 = vsyncadd [#allocation4], %s1019
      %s1021 = sshll.u32 [#allocation8], 4
      %s1022 = int_to_ptr.vmem [resolvable:$true] %s1021
      %1027 = dma.vmem_to_hbm [thread:$0]  %s1022, 128, %s9, [#allocation4], 64, 64, 4
    $region53: #{tpu_custom_call.1} parent=1 // pred_fallthru
      _
    // Predicated region
    $region54: #{tpu_custom_call.1} parent=1 // pred_check
      _
    $region55: #{tpu_custom_call.1} parent=1 // pred_check_branch
      %1029 = sbr.rel (0) target = $region57
    $region56: #{tpu_custom_call.1} parent=1 // pred_region
      %s1031 = ssub.s32 2048, 2048
      %1032 = vsyncadd [#allocation10], %s1031
      %s1033 = sshll.u32 [#allocation9], 4
      %s1034 = int_to_ptr.vmem [resolvable:$true] %s1033
      %1039 = dma.vmem_to_hbm [thread:$0]  %s1034, 2048, %s10, [#allocation10], 256, 256, 16
    $region57: #{tpu_custom_call.1} parent=1 // pred_fallthru
      _
    // Predicated region
    $region58: #{tpu_custom_call.1} parent=1 // pred_check
      _
    $region59: #{tpu_custom_call.1} parent=1 // pred_check_branch
      %1041 = sbr.rel (0) target = $region61
    $region60: #{tpu_custom_call.1} parent=1 // pred_region
      %1042 = dma.done [#allocation4], 128
    $region61: #{tpu_custom_call.1} parent=1 // pred_fallthru
      _
    // Predicated region
    $region62: #{tpu_custom_call.1} parent=1 // pred_check
      _
    $region63: #{tpu_custom_call.1} parent=1 // pred_check_branch
      %1044 = sbr.rel (0) target = $region65
    $region64: #{tpu_custom_call.1} parent=1 // pred_region
      %1045 = dma.done [#allocation10], 2048
    $region65: #{tpu_custom_call.1} parent=1 // pred_fallthru
      _
    %1046 = vsyncpa [#allocation3], 1
    %1047 = vsyncpa [#allocation6], 1
    %1048 = vsyncpa [#allocation4], 1
    %1049 = vsyncpa [#allocation10], 1

</llo_original>
